<compile_context>
chip_gen: v7x
topology: tpu7x:2x2x1
jax: 0.10.0
libtpu: 0.0.40
codegen_flags: <defaults>
</compile_context>

<pallas_src>
import functools
import numpy as np
import jax
import jax.numpy as jnp
from jax.experimental import pallas as pl
from jax.experimental.pallas import tpu as pltpu


def _round_up(x, m):
    return (x + m - 1) // m * m


# ------------------------------------------------------------ tiled linear ---
def _matmul_kernel(x_ref, w_ref, b_ref, o_ref, acc_ref):
    @pl.when(pl.program_id(2) == 0)
    def _():
        acc_ref[...] = jnp.zeros_like(acc_ref)

    acc_ref[...] += jnp.dot(x_ref[...], w_ref[...],
                            preferred_element_type=jnp.float32)

    @pl.when(pl.program_id(2) == pl.num_programs(2) - 1)
    def _():
        o_ref[...] = (acc_ref[...] + b_ref[...]).astype(o_ref.dtype)


def pallas_linear(x, w, b, *, tm=128, tn=256, tk=512, out_dtype=None):
    """y = x @ w + b with MXU tiling.  x:[M,K], w:[K,N], b:[1,N]."""
    M, K = x.shape
    _, N = w.shape
    out_dtype = out_dtype or x.dtype
    tm = min(tm, _round_up(M, 8))
    tn = min(tn, _round_up(N, 128))
    tk = min(tk, _round_up(K, 128))
    Mp, Kp, Np = _round_up(M, tm), _round_up(K, tk), _round_up(N, tn)
    xp = x if (Mp, Kp) == (M, K) else jnp.pad(x, ((0, Mp - M), (0, Kp - K)))
    wp = w if (Kp, Np) == (K, N) else jnp.pad(w, ((0, Kp - K), (0, Np - N)))
    bp = b if Np == N else jnp.pad(b, ((0, 0), (0, Np - N)))
    out = pl.pallas_call(
        _matmul_kernel,
        out_shape=jax.ShapeDtypeStruct((Mp, Np), out_dtype),
        grid=(Mp // tm, Np // tn, Kp // tk),
        in_specs=[pl.BlockSpec((tm, tk), lambda i, j, k: (i, k)),
                  pl.BlockSpec((tk, tn), lambda i, j, k: (k, j)),
                  pl.BlockSpec((1, tn), lambda i, j, k: (0, j))],
        out_specs=pl.BlockSpec((tm, tn), lambda i, j, k: (i, j)),
        scratch_shapes=[pltpu.VMEM((tm, tn), jnp.float32)],
        compiler_params=pltpu.CompilerParams(
            dimension_semantics=("parallel", "parallel", "arbitrary")),
    )(xp, wp, bp)
    return out if (Mp, Np) == (M, N) else out[:M, :N]


# ---------------------------------------- time-chunked fused LSTM stack -----
def _lstm_stack_kernel(x_ref, mask_ref, *refs, num_layers, hp, tc, bs, unroll):
    nw = 3 * num_layers
    out_ref = refs[nw]                 # [tc*bs, hp]   bf16
    gates_scr = refs[nw + 1]           # [tc*bs, 4*hp] f32
    hbuf_scr = refs[nw + 2]            # [tc*bs, hp]   bf16 (layer-to-layer)
    h_carry = refs[nw + 3]             # [L*bs, hp]    f32  persists over chunks
    c_carry = refs[nw + 4]             # [L*bs, hp]    f32

    # new batch shard starts at time-chunk 0: reset the recurrent carries
    @pl.when(pl.program_id(1) == 0)
    def _():
        h_carry[...] = jnp.zeros_like(h_carry)
        c_carry[...] = jnp.zeros_like(c_carry)

    def run_layer(layer, x_in):
        w_ih = refs[3 * layer][...]        # bf16
        w_hh = refs[3 * layer + 1][...]    # bf16
        b = refs[3 * layer + 2][...]       # f32 [1, 4*hp]
        # Hoisted input projection: one MXU matmul over the whole time chunk.
        gates_scr[...] = (jnp.dot(x_in, w_ih,
                                  preferred_element_type=jnp.float32) + b)

        def step(t, carry):
            h, c = carry                                   # f32 [bs, hp]
            r = pl.multiple_of(t * bs, bs)                 # sublane-aligned
            g = (gates_scr[pl.ds(r, bs), :]
                 + jnp.dot(h.astype(jnp.bfloat16), w_hh,
                           preferred_element_type=jnp.float32))
            # gates pre-permuted host-side to (i, f, o, g):
            sig = jax.nn.sigmoid(g[:, :3 * hp])            # i | f | o
            gg = jnp.tanh(g[:, 3 * hp:])                   # g
            i = sig[:, 0 * hp:1 * hp]
            f = sig[:, 1 * hp:2 * hp]
            o = sig[:, 2 * hp:3 * hp]
            c_new = f * c + i * gg
            h_new = o * jnp.tanh(c_new)
            hbuf_scr[pl.ds(r, bs), :] = h_new.astype(hbuf_scr.dtype)
            return h_new, c_new

        roff = layer * bs
        h0 = h_carry[pl.ds(roff, bs), :]
        c0 = c_carry[pl.ds(roff, bs), :]
        h_f, c_f = jax.lax.fori_loop(0, tc, step, (h0, c0), unroll=unroll)
        h_carry[pl.ds(roff, bs), :] = h_f
        c_carry[pl.ds(roff, bs), :] = c_f

    run_layer(0, x_ref[...])
    for layer in range(1, num_layers):
        run_layer(layer, hbuf_scr[...])

    # pad_packed_sequence: zero hidden states at t >= lengths[b]
    out_ref[...] = (hbuf_scr[...] * mask_ref[...]).astype(out_ref.dtype)


def pallas_lstm_stack(x, mask, layer_ws, *, num_layers, hp, tc, bs, n_b, ep):
    n_t = x.shape[1] // (tc * bs)
    in_arrays = [x, mask] + [w for lw in layer_ws for w in lw]
    in_specs = [
        pl.BlockSpec((None, tc * bs, ep), lambda b, t: (b, t, 0)),
        pl.BlockSpec((None, tc * bs, 1), lambda b, t: (b, t, 0)),
    ]
    for lw in layer_ws:
        for w in lw:
            in_specs.append(pl.BlockSpec(w.shape, lambda b, t: (0, 0)))
    kernel = functools.partial(_lstm_stack_kernel, num_layers=num_layers,
                               hp=hp, tc=tc, bs=bs, unroll=min(4, tc))
    return pl.pallas_call(
        kernel,
        out_shape=jax.ShapeDtypeStruct((n_b, n_t * tc * bs, hp), jnp.bfloat16),
        grid=(n_b, n_t),
        in_specs=in_specs,
        out_specs=pl.BlockSpec((None, tc * bs, hp), lambda b, t: (b, t, 0)),
        scratch_shapes=[pltpu.VMEM((tc * bs, 4 * hp), jnp.float32),
                        pltpu.VMEM((tc * bs, hp), jnp.bfloat16),
                        pltpu.VMEM((num_layers * bs, hp), jnp.float32),
                        pltpu.VMEM((num_layers * bs, hp), jnp.float32)],
        compiler_params=pltpu.CompilerParams(
            dimension_semantics=("parallel", "arbitrary"),
            vmem_limit_bytes=48 * 1024 * 1024),
    )(*in_arrays)


# -------------------------------------------------------------- parameters ---
def init_params(key, embed_size, hidden_size, vocab_size, num_layers):
    """Synthetic parameters matching DecoderRNN.__init__ shapes (weights stored
    transposed for x @ W layouts; LSTM biases pre-summed)."""
    def u(k, shape, scale):
        return jax.random.uniform(k, shape, jnp.float32, -scale, scale)

    keys = iter(jax.random.split(key, 5 + 4 * num_layers))
    p = {}
    p["fc1_w"] = u(next(keys), (2048, embed_size), 1.0 / np.sqrt(2048))
    p["fc1_b"] = u(next(keys), (1, embed_size), 1.0 / np.sqrt(2048))
    p["embed"] = jax.random.normal(next(keys), (vocab_size, embed_size),
                                   jnp.float32)
    for layer in range(num_layers):
        in_dim = embed_size if layer == 0 else hidden_size
        s = 1.0 / np.sqrt(hidden_size)
        p[f"lstm_w_ih_{layer}"] = u(next(keys), (in_dim, 4 * hidden_size), s)
        p[f"lstm_w_hh_{layer}"] = u(next(keys), (hidden_size, 4 * hidden_size), s)
        p[f"lstm_b_{layer}"] = (u(next(keys), (1, 4 * hidden_size), s)
                                + u(next(keys), (1, 4 * hidden_size), s))
    p["fc2_w"] = u(next(keys), (hidden_size, vocab_size),
                   1.0 / np.sqrt(hidden_size))
    p["fc2_b"] = u(next(keys), (1, vocab_size), 1.0 / np.sqrt(hidden_size))
    return p


def prepare_params(params, embed_size, hidden_size, vocab_size, num_layers):
    """One-time: lane-pad, permute gates (i,f,g,o)->(i,f,o,g), cast weights to
    bf16.  Hoisted out of the per-call forward (no per-step pad/cast ops)."""
    LANE = 128
    Ep = _round_up(embed_size, LANE)
    Hp = _round_up(hidden_size, LANE)
    Vp = _round_up(vocab_size, LANE)
    GATE_PERM = (0, 1, 3, 2)   # PyTorch (i,f,g,o) -> (i,f,o,g)

    def pad_gates(w, in_true, in_pad, dtype):
        w4 = w.reshape(in_true, 4, hidden_size)[:, GATE_PERM, :]
        w4 = jnp.pad(w4, ((0, in_pad - in_true), (0, 0), (0, Hp - hidden_size)))
        return w4.reshape(in_pad, 4 * Hp).astype(dtype)

    prep = dict(embed_size=embed_size, hidden_size=hidden_size,
                vocab_size=vocab_size, num_layers=num_layers,
                Ep=Ep, Hp=Hp, Vp=Vp)
    prep["fc1_w"] = jnp.pad(params["fc1_w"],
                            ((0, 0), (0, Ep - embed_size))).astype(jnp.bfloat16)
    prep["fc1_b"] = jnp.pad(params["fc1_b"], ((0, 0), (0, Ep - embed_size)))
    prep["embed"] = jnp.pad(params["embed"],
                            ((0, 0), (0, Ep - embed_size))).astype(jnp.bfloat16)
    layer_ws = []
    for l in range(num_layers):
        in_dim, in_pad = (embed_size, Ep) if l == 0 else (hidden_size, Hp)
        layer_ws.append(
            (pad_gates(params[f"lstm_w_ih_{l}"], in_dim, in_pad, jnp.bfloat16),
             pad_gates(params[f"lstm_w_hh_{l}"], hidden_size, Hp, jnp.bfloat16),
             pad_gates(params[f"lstm_b_{l}"], 1, 1, jnp.float32)))
    prep["layer_ws"] = layer_ws
    prep["fc2_w"] = jnp.pad(params["fc2_w"],
                            ((0, Hp - hidden_size),
                             (0, Vp - vocab_size))).astype(jnp.bfloat16)
    prep["fc2_b"] = jnp.pad(params["fc2_b"], ((0, 0), (0, Vp - vocab_size)))
    return prep


# ------------------------------------------------------------------ forward --
def decoder_rnn_forward(prep, features, captions, lengths):
    B = features.shape[0]
    SUB, TC_CHUNK = 8, 8
    Ep, Hp, Vp = prep["Ep"], prep["Hp"], prep["Vp"]
    vocab_size, num_layers = prep["vocab_size"], prep["num_layers"]
    Bp = _round_up(B, SUB)
    t_max = int(max(lengths))
    # Bucket padded length to a multiple of the time chunk: bounded recompiles,
    # masked tail steps are cheap.
    T_pad = _round_up(t_max, TC_CHUNK)
    # v7x: split the batch into independent "parallel" shards when big enough.
    n_b = 2 if (Bp >= 16 and Bp % 16 == 0) else 1
    bs = Bp // n_b

    features_p = jnp.pad(features, ((0, Bp - B), (0, 0))).astype(jnp.bfloat16)
    captions_p = jnp.pad(captions, ((0, Bp - B), (0, 0)))
    len_p = jnp.pad(jnp.asarray(lengths, jnp.int32), (0, Bp - B))

    # fc1 on image features: tiled bf16 MXU matmul, big K tile (weight stream)
    feat_emb = pallas_linear(features_p, prep["fc1_w"], prep["fc1_b"],
                             tk=1024, out_dtype=jnp.bfloat16)       # [Bp, Ep]

    # embedding lookup (gather glue in plain JAX)
    embeds = jnp.take(prep["embed"], captions_p, axis=0)            # [Bp,T,Ep]
    # TODO(synk): nn.Dropout(0.5) is identity in eval mode; training-mode
    # dropout would need pltpu.prng_* and cannot bit-match PyTorch RNG anyway.

    # cat(features.unsqueeze(1), embeddings) -> time-major, bucketed length
    seq = jnp.concatenate([feat_emb[:, None, :], embeds], axis=1)   # [Bp,T+1,Ep]
    seq_t = jnp.transpose(seq, (1, 0, 2))                           # [T+1,Bp,Ep]
    T_total = seq_t.shape[0]
    if T_pad <= T_total:
        seq_t = seq_t[:T_pad]
    else:
        seq_t = jnp.pad(seq_t, ((0, T_pad - T_total), (0, 0), (0, 0)))
    x = (seq_t.reshape(T_pad, n_b, bs, Ep).transpose(1, 0, 2, 3)
              .reshape(n_b, T_pad * bs, Ep)).astype(jnp.bfloat16)

    # validity mask (t < lengths[b]); zero for batch-padding rows
    mask = (jnp.arange(T_pad, dtype=jnp.int32)[:, None] < len_p[None, :])
    mask = (mask.astype(jnp.bfloat16).reshape(T_pad, n_b, bs, 1)
                .transpose(1, 0, 2, 3).reshape(n_b, T_pad * bs, 1))

    # fused multi-layer LSTM (time-chunked, pipelined, carried h/c) -> hiddens
    hid = pallas_lstm_stack(x, mask, prep["layer_ws"],
                            num_layers=num_layers, hp=Hp,
                            tc=TC_CHUNK, bs=bs, n_b=n_b, ep=Ep)

    # fc2 as a separately tiled matmul (bounded VMEM even for 10k+ vocab)
    logits_flat = pallas_linear(hid.reshape(n_b * T_pad * bs, Hp),
                                prep["fc2_w"], prep["fc2_b"],
                                out_dtype=jnp.float32)
    logits = (logits_flat.reshape(n_b, T_pad, bs, Vp)
                         .transpose(1, 0, 2, 3).reshape(T_pad, Bp, Vp))
    return jnp.transpose(logits, (1, 0, 2))[:B, :t_max, :vocab_size]


# --------------------------------------------------------------------- main --
if __name__ == "__main__":
    embed_size, hidden_size, vocab_size, num_layers = 32, 32, 64, 2
    B, T = 2, 8
    lengths = [9, 7]          # sorted descending, <= T + 1

    key = jax.random.PRNGKey(0)
    k_par, k_feat, k_cap = jax.random.split(key, 3)

    params = init_params(k_par, embed_size, hidden_size, vocab_size, num_layers)
    prep = prepare_params(params, embed_size, hidden_size, vocab_size,
                          num_layers)
    features = jax.random.normal(k_feat, (B, 2048), jnp.float32)
    captions = jax.random.randint(k_cap, (B, T), 0, vocab_size, jnp.int32)

    outputs = decoder_rnn_forward(prep, features, captions, lengths)
    outputs = jax.block_until_ready(outputs)
    assert outputs.shape == (B, max(lengths), vocab_size)
    assert bool(jnp.all(jnp.isfinite(outputs)))
    print("KERNEL_OK")
</pallas_src>

<mosaic_0001>
module attributes {stable_mosaic.version = 11 : i64} {
  func.func @_matmul_kernel(%arg0: i32, %arg1: i32, %arg2: i32, %arg3: memref<8x1024xbf16, #tpu.memory_space<vmem>>, %arg4: memref<1024x128xbf16, #tpu.memory_space<vmem>>, %arg5: memref<1x128xf32, #tpu.memory_space<vmem>>, %arg6: memref<8x128xbf16, #tpu.memory_space<vmem>>, %arg7: memref<8x128xf32, #tpu.memory_space<vmem>>) attributes {dimension_semantics = [#tpu.dimension_semantics<parallel>, #tpu.dimension_semantics<parallel>, #tpu.dimension_semantics<arbitrary>], iteration_bounds = array<i64: 1, 1, 2>, scalar_prefetch = 0 : i64, scratch_operands = 1 : i64, tpu.core_type = #tpu.core_type<tc>, window_params = [{transform_indices = @transform_0, window_bounds = array<i64: 8, 1024>}, {transform_indices = @transform_1, window_bounds = array<i64: 1024, 128>}, {transform_indices = @transform_2, window_bounds = array<i64: 1, 128>}, {transform_indices = @transform_3, window_bounds = array<i64: 8, 128>}]} {
    %c0_i32 = arith.constant 0 : i32
    %0 = arith.cmpi eq, %arg2, %c0_i32 : i32
    %1 = arith.extui %0 : i1 to i32
    %c0_i32_0 = arith.constant 0 : i32
    %2 = arith.cmpi ne, %1, %c0_i32_0 : i32
    scf.if %2 {
      %cst_9 = arith.constant 0.000000e+00 : f32
      %12 = vector.broadcast %cst_9 : f32 to vector<8x128xf32>
      %c0_10 = arith.constant 0 : index
      %c0_11 = arith.constant 0 : index
      %13 = vector.load %arg7[%c0_10, %c0_11] : memref<8x128xf32, #tpu.memory_space<vmem>>, vector<8x128xf32>
      tpu.vector_store %arg7[%c0_10, %c0_11], %12 {strides = array<i32>} : memref<8x128xf32, #tpu.memory_space<vmem>>, vector<8x128xf32>,
    } else {
    }
    %c0 = arith.constant 0 : index
    %c0_1 = arith.constant 0 : index
    %3 = vector.load %arg7[%c0, %c0_1] : memref<8x128xf32, #tpu.memory_space<vmem>>, vector<8x128xf32>
    %c0_2 = arith.constant 0 : index
    %c0_3 = arith.constant 0 : index
    %4 = vector.load %arg3[%c0_2, %c0_3] : memref<8x1024xbf16, #tpu.memory_space<vmem>>, vector<8x1024xbf16>
    %c0_4 = arith.constant 0 : index
    %c0_5 = arith.constant 0 : index
    %5 = vector.load %arg4[%c0_4, %c0_5] : memref<1024x128xbf16, #tpu.memory_space<vmem>>, vector<1024x128xbf16>
    %cst = arith.constant dense<0.000000e+00> : vector<8x128xf32>
    %6 = tpu.matmul %4, %5, %cst {dimension_numbers = #tpu.dot_dimension_numbers<[1], [0], [0], [1], [0, 0, 1, 1], [], []>} : vector<8x1024xbf16>, vector<1024x128xbf16>, vector<8x128xf32> -> vector<8x128xf32>
    %7 = arith.addf %3, %6 : vector<8x128xf32>
    %c0_6 = arith.constant 0 : index
    %c0_7 = arith.constant 0 : index
    %8 = vector.load %arg7[%c0_6, %c0_7] : memref<8x128xf32, #tpu.memory_space<vmem>>, vector<8x128xf32>
    tpu.vector_store %arg7[%c0_6, %c0_7], %7 {strides = array<i32>} : memref<8x128xf32, #tpu.memory_space<vmem>>, vector<8x128xf32>,
    %c1_i32 = arith.constant 1 : i32
    %9 = arith.cmpi eq, %arg2, %c1_i32 : i32
    %10 = arith.extui %9 : i1 to i32
    %c0_i32_8 = arith.constant 0 : i32
    %11 = arith.cmpi ne, %10, %c0_i32_8 : i32
    scf.if %11 {
      %c0_9 = arith.constant 0 : index
      %c0_10 = arith.constant 0 : index
      %12 = vector.load %arg7[%c0_9, %c0_10] : memref<8x128xf32, #tpu.memory_space<vmem>>, vector<8x128xf32>
      %c0_11 = arith.constant 0 : index
      %c0_12 = arith.constant 0 : index
      %13 = vector.load %arg5[%c0_11, %c0_12] : memref<1x128xf32, #tpu.memory_space<vmem>>, vector<1x128xf32>
      %14 = vector.broadcast %13 : vector<1x128xf32> to vector<8x128xf32>
      %15 = arith.addf %12, %14 : vector<8x128xf32>
      %16 = arith.truncf %15 : vector<8x128xf32> to vector<8x128xbf16>
      %c0_13 = arith.constant 0 : index
      %c0_14 = arith.constant 0 : index
      %17 = vector.load %arg6[%c0_13, %c0_14] : memref<8x128xbf16, #tpu.memory_space<vmem>>, vector<8x128xbf16>
      tpu.vector_store %arg6[%c0_13, %c0_14], %16 {strides = array<i32>} : memref<8x128xbf16, #tpu.memory_space<vmem>>, vector<8x128xbf16>,
    } else {
    }
    return
  }
  func.func @transform_0(%arg0: i32, %arg1: i32, %arg2: i32) -> (i32, i32) {
    %c0_i32 = arith.constant 0 : i32
    return %arg0, %arg2 : i32, i32
  }
  func.func @transform_1(%arg0: i32, %arg1: i32, %arg2: i32) -> (i32, i32) {
    %c0_i32 = arith.constant 0 : i32
    return %arg2, %arg1 : i32, i32
  }
  func.func @transform_2(%arg0: i32, %arg1: i32, %arg2: i32) -> (i32, i32) {
    %c0_i32 = arith.constant 0 : i32
    %c0_i32_0 = arith.constant 0 : i32
    return %c0_i32, %arg1 : i32, i32
  }
  func.func @transform_3(%arg0: i32, %arg1: i32, %arg2: i32) -> (i32, i32) {
    %c0_i32 = arith.constant 0 : i32
    return %arg0, %arg1 : i32, i32
  }
}

</mosaic_0001>

<llo_original>
// kernel: tpu_custom_call.1
$region0: #{tpu_custom_call.1}
  #allocation0 [shape = 'u32[]', space=smem, size = 0x4, offset = 0x4, fixed_abs, tag = 'smem constant byte address 0x4 - core index']
  #allocation1 [shape = 'u32[144,128]{1,0:T(1,128)}', space=vmem, size = 0x12000, scoped, tag = 'internal scratch']
  #allocation2 [shape = 'f32[8,128]{1,0:T(8,128)}', space=vmem, size = 0x1000, scoped, tag = 'scratch operand']
  %s0 = inlined_call_operand.hbm [shape: bf16[8,2048], index: 0, kind: input, shape index: {}]
  %s1 = inlined_call_operand.hbm [shape: bf16[2048,128], index: 1, kind: input, shape index: {}]
  %s2 = inlined_call_operand.vmem [shape: f32[1,128], index: 2, kind: input, shape index: {}]
  %s3 = inlined_call_operand.hbm [shape: bf16[8,128], index: 3, kind: output, shape index: {}]
  %s4 = sld [smem:[#allocation0]]
  $region61: #{tpu_custom_call.1} parent=0
    _
  %s6 = ssub.s32 1, %s4
  %s7 = scalar_select 0, %s6, %s4
  $region1: #{tpu_custom_call.1} parent=0
    #allocation3 [shape = 'u8[32768]{0}', space=vmem, size = 0x8000, scoped, tag = 'input window, operand 0']
    #allocation4 [shape = 's32[2]{0}', space=sflag, size = 0x8, scoped, tag = 'scoped memory for tpu_custom_call.1']
    #allocation5 [shape = 's32[2]{0}', space=sflag, size = 0x8, scoped, tag = 'scoped memory for tpu_custom_call.1']
    #allocation6 [shape = 'u8[524288]{0}', space=vmem, size = 0x80000, scoped, tag = 'input window, operand 1']
    #allocation7 [shape = 's32[2]{0}', space=sflag, size = 0x8, scoped, tag = 'scoped memory for tpu_custom_call.1']
    #allocation8 [shape = 'u8[2048]{0}', space=vmem, size = 0x800, scoped, tag = 'output window, operand 0, single buffered']
    %8 = vsyncpa [#allocation4], 0
    %s9 = scalar_lea.sflag [#allocation4], 1
    %10 = vsyncpa %s9, 0
    %11 = vsyncpa [#allocation7], 0
    %s12 = scalar_lea.sflag [#allocation7], 1
    %13 = vsyncpa %s12, 0
    %14 = vsyncpa [#allocation5], 0
    loop: start=0, step=1, limit=4
    $region2: #{tpu_custom_call.1} parent=1 // loop_pre_header
      _
    $region3: #{tpu_custom_call.1} parent=1 // loop_header
      %s16 = sphi 0, %s20
      %p17 = scmp.ge.s32.totalorder %s16, 4
      %s23 = sphi 0, %s42
      %s24 = sphi 0, %s38
      %s25 = sphi 0, %s34
      %s26 = sphi 0, %s23
      %s27 = sphi 0, %s24
      %s28 = sphi 0, %s25
      %s29 = sphi 0, %s26
      %s30 = sphi 0, %s27
      %s31 = sphi 0, %s28
      %s47 = sphi 0, %s49
      %s50 = sphi 0, %s47
      %s51 = sphi 0, %s50
      %s67 = sphi 0, %s51
      %s75 = sphi 0, %s77
      %s78 = sphi 0, %s75
      %s79 = sphi 0, %s78
      %s95 = sphi 0, %s79
      %s101 = sphi 0, %s103
      %s104 = sphi 0, %s101
      %s105 = sphi 0, %s104
      %s121 = sphi 0, %s105
      %s129 = sphi 0, %s131
      %s132 = sphi 0, %s129
      %s133 = sphi 0, %s132
      %s149 = sphi 0, %s133
    $region4: #{tpu_custom_call.1} parent=1 // loop_header_branch
      %19 = sbr.rel (%p17) target = $region8
    $region5: #{tpu_custom_call.1} parent=1 // loop_body
      %s21 = ssub.s32 %s16, 1
      %s22 = ssub.s32 %s16, 2
      %s32 = sadd.s32 1, %s25
      %p33 = scmp.ge.s32.totalorder %s32, 2
      %s34 = scalar_select %p33, 0, %s32
      %s35 = sadd.s32 1, %s24
      %s36 = scalar_select %p33, %s35, %s24
      %p37 = scmp.ge.s32.totalorder %s36, 1
      %s38 = scalar_select %p37, 0, %s36
      %s39 = sadd.s32 1, %s23
      %s40 = scalar_select %p37, %s39, %s23
      %p41 = scmp.ge.s32.totalorder %s40, 1
      %s42 = scalar_select %p41, 0, %s40
      %s43 = ssub.s32 %s23, %s42
      %s44 = ssub.s32 %s25, %s34
      %s45 = sor.u32 %s43, %s44
      %p46 = scmp.eq.s32.totalorder %s45, 0
      %s48 = sadd.s32 %s47, 1
      %s49 = scalar_select %p46, %s47, %s48
      %p52 = pneg %p46
      %p53 = scmp.eq.s32.totalorder %s16, 1
      %p54 = por %p52, %p53
      %p55 = scmp.ne.s32.totalorder %s47, %s50
      %p56 = scmp.eq.s32.totalorder %s16, 0
      %p57 = por %p55, %p56
      %p58 = scmp.ne.s32.totalorder %s47, %s50
      %p59 = scmp.eq.s32.totalorder %s21, 1
      %p60 = por %p58, %p59
      %p61 = scmp.ne.s32.totalorder %s50, %s51
      %p62 = scmp.eq.s32.totalorder %s21, 0
      %p63 = por %p61, %p62
      %p64 = scmp.ne.s32.totalorder %s50, %s51
      %p65 = scmp.eq.s32.totalorder %s22, 1
      %p66 = por %p64, %p65
      %p68 = scmp.ne.s32.totalorder %s51, %s67
      %p69 = scmp.eq.s32.totalorder %s22, 0
      %p70 = por %p68, %p69
      %s71 = ssub.s32 %s25, %s34
      %s72 = ssub.s32 %s24, %s38
      %s73 = sor.u32 %s71, %s72
      %p74 = scmp.eq.s32.totalorder %s73, 0
      %s76 = sadd.s32 %s75, 1
      %s77 = scalar_select %p74, %s75, %s76
      %p80 = pneg %p74
      %p81 = scmp.eq.s32.totalorder %s16, 1
      %p82 = por %p80, %p81
      %p83 = scmp.ne.s32.totalorder %s75, %s78
      %p84 = scmp.eq.s32.totalorder %s16, 0
      %p85 = por %p83, %p84
      %p86 = scmp.ne.s32.totalorder %s75, %s78
      %p87 = scmp.eq.s32.totalorder %s21, 1
      %p88 = por %p86, %p87
      %p89 = scmp.ne.s32.totalorder %s78, %s79
      %p90 = scmp.eq.s32.totalorder %s21, 0
      %p91 = por %p89, %p90
      %p92 = scmp.ne.s32.totalorder %s78, %s79
      %p93 = scmp.eq.s32.totalorder %s22, 1
      %p94 = por %p92, %p93
      %p96 = scmp.ne.s32.totalorder %s79, %s95
      %p97 = scmp.eq.s32.totalorder %s22, 0
      %p98 = por %p96, %p97
      %s99 = ssub.s32 %s24, %s38
      %p100 = scmp.eq.s32.totalorder %s99, 0
      %s102 = sadd.s32 %s101, 1
      %s103 = scalar_select %p100, %s101, %s102
      %p106 = pneg %p100
      %p107 = scmp.eq.s32.totalorder %s16, 1
      %p108 = por %p106, %p107
      %p109 = scmp.ne.s32.totalorder %s101, %s104
      %p110 = scmp.eq.s32.totalorder %s16, 0
      %p111 = por %p109, %p110
      %p112 = scmp.ne.s32.totalorder %s101, %s104
      %p113 = scmp.eq.s32.totalorder %s21, 1
      %p114 = por %p112, %p113
      %p115 = scmp.ne.s32.totalorder %s104, %s105
      %p116 = scmp.eq.s32.totalorder %s21, 0
      %p117 = por %p115, %p116
      %p118 = scmp.ne.s32.totalorder %s104, %s105
      %p119 = scmp.eq.s32.totalorder %s22, 1
      %p120 = por %p118, %p119
      %p122 = scmp.ne.s32.totalorder %s105, %s121
      %p123 = scmp.eq.s32.totalorder %s22, 0
      %p124 = por %p122, %p123
      %s125 = ssub.s32 %s23, %s42
      %s126 = ssub.s32 %s24, %s38
      %s127 = sor.u32 %s125, %s126
      %p128 = scmp.eq.s32.totalorder %s127, 0
      %s130 = sadd.s32 %s129, 1
      %s131 = scalar_select %p128, %s129, %s130
      %p134 = pneg %p128
      %p135 = scmp.eq.s32.totalorder %s16, 1
      %p136 = por %p134, %p135
      %p137 = scmp.ne.s32.totalorder %s129, %s132
      %p138 = scmp.eq.s32.totalorder %s16, 0
      %p139 = por %p137, %p138
      %p140 = scmp.ne.s32.totalorder %s129, %s132
      %p141 = scmp.eq.s32.totalorder %s21, 1
      %p142 = por %p140, %p141
      %p143 = scmp.ne.s32.totalorder %s132, %s133
      %p144 = scmp.eq.s32.totalorder %s21, 0
      %p145 = por %p143, %p144
      %p146 = scmp.ne.s32.totalorder %s132, %s133
      %p147 = scmp.eq.s32.totalorder %s22, 1
      %p148 = por %p146, %p147
      %p150 = scmp.ne.s32.totalorder %s133, %s149
      %p151 = scmp.eq.s32.totalorder %s22, 0
      %p152 = por %p150, %p151
      %p153 = scmp.le.s32.totalorder 1, %s16
      %p154 = scmp.lt.s32.totalorder %s16, 3
      %p155 = pnand %p153, %p154
      %p156 = pneg %p155
      // Predicated region
      $region9: #{tpu_custom_call.1} parent=5 // pred_check
        _
      $region10: #{tpu_custom_call.1} parent=5 // pred_check_branch
        %158 = sbr.rel (%p155) target = $region12
      $region11: #{tpu_custom_call.1} parent=5 // pred_region
        %s159 = ssub.s32 %s16, 1
        // Predicated region
        $region13: #{tpu_custom_call.1} parent=11 // pred_check
          %p160 = pneg %p117
        $region14: #{tpu_custom_call.1} parent=11 // pred_check_branch
          %162 = sbr.rel (%p160) target = $region16
        $region15: #{tpu_custom_call.1} parent=11 // pred_region
          %p163 = scmp.lt.s32.totalorder %s27, 0
          %s164 = scalar_select %p163, %s27, 0
          %s165 = scalar_lea.vmem %s2, %s164
        $region16: #{tpu_custom_call.1} parent=11 // pred_fallthru
          _
      $region12: #{tpu_custom_call.1} parent=5 // pred_fallthru
        _
      %p166 = scmp.lt.s32.totalorder %s16, 2
      // Predicated region
      $region17: #{tpu_custom_call.1} parent=5 // pred_check
        %p167 = pneg %p166
      $region18: #{tpu_custom_call.1} parent=5 // pred_check_branch
        %169 = sbr.rel (%p167) target = $region20
      $region19: #{tpu_custom_call.1} parent=5 // pred_region
        // Predicated region
        $region21: #{tpu_custom_call.1} parent=19 // pred_check
          %p170 = pneg %p57
        $region22: #{tpu_custom_call.1} parent=19 // pred_check_branch
          %172 = sbr.rel (%p170) target = $region24
        $region23: #{tpu_custom_call.1} parent=19 // pred_region
          %s173 = sand.u32 %s47, 1
          %s174 = scalar_lea.sflag [#allocation4], %s173
          %s175 = sand.u32 %s47, 1
          %s176 = smul.addr %s175, 32
          %s177 = scalar_lea.vmem [#allocation3], %s176
          %s178 = smul.u32 8, %s25
          %s180 = ssub.s32 512, 512
          %181 = vsyncadd %s174, %s180
          %s182 = smul.addr %s23, 16
          %s183 = sadd.s32 %s178, %s182
          %s184 = smul.addr %s183, 64
          %s185 = scalar_lea.hbm %s0, %s184
          %s187 = sshll.u32 %s177, 4
          %s188 = int_to_ptr.vmem [resolvable:$true] %s187
          %190 = dma.hbm_to_vmem [thread:$0]  %s185, 512, %s188, %s174
        $region24: #{tpu_custom_call.1} parent=19 // pred_fallthru
          _
        // Predicated region
        $region25: #{tpu_custom_call.1} parent=19 // pred_check
          %p191 = pneg %p85
        $region26: #{tpu_custom_call.1} parent=19 // pred_check_branch
          %193 = sbr.rel (%p191) target = $region28
        $region27: #{tpu_custom_call.1} parent=19 // pred_region
          %s194 = sand.u32 %s75, 1
          %s195 = scalar_lea.sflag [#allocation7], %s194
          %s196 = sand.u32 %s75, 1
          %s197 = smul.addr %s196, 512
          %s198 = scalar_lea.vmem [#allocation6], %s197
          %s199 = smul.u32 128, %s25
          %s201 = ssub.s32 8192, 8192
          %202 = vsyncadd %s195, %s201
          %s203 = sadd.s32 %s24, %s199
          %s204 = smul.addr %s203, 64
          %s205 = scalar_lea.hbm %s1, %s204
          %s206 = sshll.u32 %s198, 4
          %s207 = int_to_ptr.vmem [resolvable:$true] %s206
          %212 = dma.hbm_to_vmem [thread:$0]  %s205, 8192, %s207, %s195, 64, 64, 4
        $region28: #{tpu_custom_call.1} parent=19 // pred_fallthru
          _
      $region20: #{tpu_custom_call.1} parent=5 // pred_fallthru
        _
      %p213 = scmp.le.s32.totalorder 1, %s16
      %p214 = scmp.lt.s32.totalorder %s16, 3
      %p215 = pnand %p213, %p214
      %p216 = pneg %p215
      // Predicated region
      $region29: #{tpu_custom_call.1} parent=5 // pred_check
        _
      $region30: #{tpu_custom_call.1} parent=5 // pred_check_branch
        %218 = sbr.rel (%p215) target = $region32
      $region31: #{tpu_custom_call.1} parent=5 // pred_region
        %s219 = ssub.s32 %s16, 1
        %s220 = sand.u32 %s50, 1
        %s221 = scalar_lea.sflag [#allocation4], %s220
        %s222 = sand.u32 %s50, 1
        %s223 = smul.addr %s222, 32
        %s224 = scalar_lea.vmem [#allocation3], %s223
        // Predicated region
        $region33: #{tpu_custom_call.1} parent=31 // pred_check
          %p225 = pneg %p63
        $region34: #{tpu_custom_call.1} parent=31 // pred_check_branch
          %227 = sbr.rel (%p225) target = $region36
        $region35: #{tpu_custom_call.1} parent=31 // pred_region
          %228 = dma.done %s221, 512
        $region36: #{tpu_custom_call.1} parent=31 // pred_fallthru
          _
        %s229 = sand.u32 %s78, 1
        %s230 = scalar_lea.sflag [#allocation7], %s229
        %s231 = sand.u32 %s78, 1
        %s232 = smul.addr %s231, 512
        %s233 = scalar_lea.vmem [#allocation6], %s232
        // Predicated region
        $region37: #{tpu_custom_call.1} parent=31 // pred_check
          %p234 = pneg %p91
        $region38: #{tpu_custom_call.1} parent=31 // pred_check_branch
          %236 = sbr.rel (%p234) target = $region40
        $region39: #{tpu_custom_call.1} parent=31 // pred_region
          %237 = dma.done %s230, 8192
        $region40: #{tpu_custom_call.1} parent=31 // pred_fallthru
          _
        %s238 = sand.u32 %s50, 1
        %s239 = scalar_lea.sflag [#allocation4], %s238
        %s240 = sand.u32 %s50, 1
        %s241 = smul.addr %s240, 32
        %s242 = scalar_lea.vmem [#allocation3], %s241
        %p243 = pneg %p63
        %p244 = pneg %p60
        %s245 = sand.u32 %s78, 1
        %s246 = scalar_lea.sflag [#allocation7], %s245
        %s247 = sand.u32 %s78, 1
        %s248 = smul.addr %s247, 512
        %s249 = scalar_lea.vmem [#allocation6], %s248
        %p250 = pneg %p91
        %p251 = pneg %p88
        %p252 = scmp.lt.s32.totalorder %s27, 0
        %s253 = scalar_select %p252, %s27, 0
        %s254 = scalar_lea.vmem %s2, %s253
        %p255 = pneg %p117
        %p256 = pneg %p114
        %p257 = pneg %p145
        %p258 = pneg %p142
        %s259 = smul.u32 8, %s28
        %s260 = smul.u32 128, %s28
        %p261 = scmp.lt.s32.totalorder %s27, 0
        %s262 = scalar_select %p261, %s27, 0
        %s263 = scalar_lea.vmem %s2, %s262
        %p265 = scmp.eq.s32.totalorder %s28, 0
        // Predicated region
        $region41: #{tpu_custom_call.1} parent=31 // pred_check
          %p266 = pneg %p265
        $region42: #{tpu_custom_call.1} parent=31 // pred_check_branch
          %268 = sbr.rel (%p266) target = $region44
        $region43: #{tpu_custom_call.1} parent=31 // pred_region
          %269 = vst [vmem:[#allocation2] sm:$0xff] 0.0
        $region44: #{tpu_custom_call.1} parent=31 // pred_fallthru
          _
        %v270 = vld [vmem:[#allocation2] sm:$0xff]
        %v271 = vld [vmem:[%s224] sm:$0xff]
        %v272 = vld [vmem:[%s224 + $0x8] sm:$0xff]
        %v273 = vld [vmem:[%s224 + $0x10] sm:$0xff]
        %v274 = vld [vmem:[%s224 + $0x18] sm:$0xff]
        %v275 = vld [vmem:[%s233] sm:$0xf]
        %v276 = vld [vmem:[%s233 + $0x4] sm:$0xf]
        %v277 = vld [vmem:[%s233 + $0x8] sm:$0xf]
        %v278 = vld [vmem:[%s233 + $0xc] sm:$0xf]
        %v279 = vld [vmem:[%s233 + $0x10] sm:$0xf]
        %v280 = vld [vmem:[%s233 + $0x14] sm:$0xf]
        %v281 = vld [vmem:[%s233 + $0x18] sm:$0xf]
        %v282 = vld [vmem:[%s233 + $0x1c] sm:$0xf]
        %v283 = vld [vmem:[%s233 + $0x20] sm:$0xf]
        %v284 = vld [vmem:[%s233 + $0x24] sm:$0xf]
        %v285 = vld [vmem:[%s233 + $0x28] sm:$0xf]
        %v286 = vld [vmem:[%s233 + $0x2c] sm:$0xf]
        %v287 = vld [vmem:[%s233 + $0x30] sm:$0xf]
        %v288 = vld [vmem:[%s233 + $0x34] sm:$0xf]
        %v289 = vld [vmem:[%s233 + $0x38] sm:$0xf]
        %v290 = vld [vmem:[%s233 + $0x3c] sm:$0xf]
        %v291 = vld [vmem:[%s233 + $0x40] sm:$0xf]
        %v292 = vld [vmem:[%s233 + $0x44] sm:$0xf]
        %v293 = vld [vmem:[%s233 + $0x48] sm:$0xf]
        %v294 = vld [vmem:[%s233 + $0x4c] sm:$0xf]
        %v295 = vld [vmem:[%s233 + $0x50] sm:$0xf]
        %v296 = vld [vmem:[%s233 + $0x54] sm:$0xf]
        %v297 = vld [vmem:[%s233 + $0x58] sm:$0xf]
        %v298 = vld [vmem:[%s233 + $0x5c] sm:$0xf]
        %v299 = vld [vmem:[%s233 + $0x60] sm:$0xf]
        %v300 = vld [vmem:[%s233 + $0x64] sm:$0xf]
        %v301 = vld [vmem:[%s233 + $0x68] sm:$0xf]
        %v302 = vld [vmem:[%s233 + $0x6c] sm:$0xf]
        %v303 = vld [vmem:[%s233 + $0x70] sm:$0xf]
        %v304 = vld [vmem:[%s233 + $0x74] sm:$0xf]
        %v305 = vld [vmem:[%s233 + $0x78] sm:$0xf]
        %v306 = vld [vmem:[%s233 + $0x7c] sm:$0xf]
        %v307 = vld [vmem:[%s233 + $0x80] sm:$0xf]
        %v308 = vld [vmem:[%s233 + $0x84] sm:$0xf]
        %v309 = vld [vmem:[%s233 + $0x88] sm:$0xf]
        %v310 = vld [vmem:[%s233 + $0x8c] sm:$0xf]
        %v311 = vld [vmem:[%s233 + $0x90] sm:$0xf]
        %v312 = vld [vmem:[%s233 + $0x94] sm:$0xf]
        %v313 = vld [vmem:[%s233 + $0x98] sm:$0xf]
        %v314 = vld [vmem:[%s233 + $0x9c] sm:$0xf]
        %v315 = vld [vmem:[%s233 + $0xa0] sm:$0xf]
        %v316 = vld [vmem:[%s233 + $0xa4] sm:$0xf]
        %v317 = vld [vmem:[%s233 + $0xa8] sm:$0xf]
        %v318 = vld [vmem:[%s233 + $0xac] sm:$0xf]
        %v319 = vld [vmem:[%s233 + $0xb0] sm:$0xf]
        %v320 = vld [vmem:[%s233 + $0xb4] sm:$0xf]
        %v321 = vld [vmem:[%s233 + $0xb8] sm:$0xf]
        %v322 = vld [vmem:[%s233 + $0xbc] sm:$0xf]
        %v323 = vld [vmem:[%s233 + $0xc0] sm:$0xf]
        %v324 = vld [vmem:[%s233 + $0xc4] sm:$0xf]
        %v325 = vld [vmem:[%s233 + $0xc8] sm:$0xf]
        %v326 = vld [vmem:[%s233 + $0xcc] sm:$0xf]
        %v327 = vld [vmem:[%s233 + $0xd0] sm:$0xf]
        %v328 = vld [vmem:[%s233 + $0xd4] sm:$0xf]
        %v329 = vld [vmem:[%s233 + $0xd8] sm:$0xf]
        %v330 = vld [vmem:[%s233 + $0xdc] sm:$0xf]
        %v331 = vld [vmem:[%s233 + $0xe0] sm:$0xf]
        %v332 = vld [vmem:[%s233 + $0xe4] sm:$0xf]
        %v333 = vld [vmem:[%s233 + $0xe8] sm:$0xf]
        %v334 = vld [vmem:[%s233 + $0xec] sm:$0xf]
        %v335 = vld [vmem:[%s233 + $0xf0] sm:$0xf]
        %v336 = vld [vmem:[%s233 + $0xf4] sm:$0xf]
        %v337 = vld [vmem:[%s233 + $0xf8] sm:$0xf]
        %v338 = vld [vmem:[%s233 + $0xfc] sm:$0xf]
        %v339 = vld [vmem:[%s233 + $0x100] sm:$0xf]
        %v340 = vld [vmem:[%s233 + $0x104] sm:$0xf]
        %v341 = vld [vmem:[%s233 + $0x108] sm:$0xf]
        %v342 = vld [vmem:[%s233 + $0x10c] sm:$0xf]
        %v343 = vld [vmem:[%s233 + $0x110] sm:$0xf]
        %v344 = vld [vmem:[%s233 + $0x114] sm:$0xf]
        %v345 = vld [vmem:[%s233 + $0x118] sm:$0xf]
        %v346 = vld [vmem:[%s233 + $0x11c] sm:$0xf]
        %v347 = vld [vmem:[%s233 + $0x120] sm:$0xf]
        %v348 = vld [vmem:[%s233 + $0x124] sm:$0xf]
        %v349 = vld [vmem:[%s233 + $0x128] sm:$0xf]
        %v350 = vld [vmem:[%s233 + $0x12c] sm:$0xf]
        %v351 = vld [vmem:[%s233 + $0x130] sm:$0xf]
        %v352 = vld [vmem:[%s233 + $0x134] sm:$0xf]
        %v353 = vld [vmem:[%s233 + $0x138] sm:$0xf]
        %v354 = vld [vmem:[%s233 + $0x13c] sm:$0xf]
        %v355 = vld [vmem:[%s233 + $0x140] sm:$0xf]
        %v356 = vld [vmem:[%s233 + $0x144] sm:$0xf]
        %v357 = vld [vmem:[%s233 + $0x148] sm:$0xf]
        %v358 = vld [vmem:[%s233 + $0x14c] sm:$0xf]
        %v359 = vld [vmem:[%s233 + $0x150] sm:$0xf]
        %v360 = vld [vmem:[%s233 + $0x154] sm:$0xf]
        %v361 = vld [vmem:[%s233 + $0x158] sm:$0xf]
        %v362 = vld [vmem:[%s233 + $0x15c] sm:$0xf]
        %v363 = vld [vmem:[%s233 + $0x160] sm:$0xf]
        %v364 = vld [vmem:[%s233 + $0x164] sm:$0xf]
        %v365 = vld [vmem:[%s233 + $0x168] sm:$0xf]
        %v366 = vld [vmem:[%s233 + $0x16c] sm:$0xf]
        %v367 = vld [vmem:[%s233 + $0x170] sm:$0xf]
        %v368 = vld [vmem:[%s233 + $0x174] sm:$0xf]
        %v369 = vld [vmem:[%s233 + $0x178] sm:$0xf]
        %v370 = vld [vmem:[%s233 + $0x17c] sm:$0xf]
        %v371 = vld [vmem:[%s233 + $0x180] sm:$0xf]
        %v372 = vld [vmem:[%s233 + $0x184] sm:$0xf]
        %v373 = vld [vmem:[%s233 + $0x188] sm:$0xf]
        %v374 = vld [vmem:[%s233 + $0x18c] sm:$0xf]
        %v375 = vld [vmem:[%s233 + $0x190] sm:$0xf]
        %v376 = vld [vmem:[%s233 + $0x194] sm:$0xf]
        %v377 = vld [vmem:[%s233 + $0x198] sm:$0xf]
        %v378 = vld [vmem:[%s233 + $0x19c] sm:$0xf]
        %v379 = vld [vmem:[%s233 + $0x1a0] sm:$0xf]
        %v380 = vld [vmem:[%s233 + $0x1a4] sm:$0xf]
        %v381 = vld [vmem:[%s233 + $0x1a8] sm:$0xf]
        %v382 = vld [vmem:[%s233 + $0x1ac] sm:$0xf]
        %v383 = vld [vmem:[%s233 + $0x1b0] sm:$0xf]
        %v384 = vld [vmem:[%s233 + $0x1b4] sm:$0xf]
        %v385 = vld [vmem:[%s233 + $0x1b8] sm:$0xf]
        %v386 = vld [vmem:[%s233 + $0x1bc] sm:$0xf]
        %v387 = vld [vmem:[%s233 + $0x1c0] sm:$0xf]
        %v388 = vld [vmem:[%s233 + $0x1c4] sm:$0xf]
        %v389 = vld [vmem:[%s233 + $0x1c8] sm:$0xf]
        %v390 = vld [vmem:[%s233 + $0x1cc] sm:$0xf]
        %v391 = vld [vmem:[%s233 + $0x1d0] sm:$0xf]
        %v392 = vld [vmem:[%s233 + $0x1d4] sm:$0xf]
        %v393 = vld [vmem:[%s233 + $0x1d8] sm:$0xf]
        %v394 = vld [vmem:[%s233 + $0x1dc] sm:$0xf]
        %v395 = vld [vmem:[%s233 + $0x1e0] sm:$0xf]
        %v396 = vld [vmem:[%s233 + $0x1e4] sm:$0xf]
        %v397 = vld [vmem:[%s233 + $0x1e8] sm:$0xf]
        %v398 = vld [vmem:[%s233 + $0x1ec] sm:$0xf]
        %v399 = vld [vmem:[%s233 + $0x1f0] sm:$0xf]
        %v400 = vld [vmem:[%s233 + $0x1f4] sm:$0xf]
        %v401 = vld [vmem:[%s233 + $0x1f8] sm:$0xf]
        %v402 = vld [vmem:[%s233 + $0x1fc] sm:$0xf]
        %v407 = vunpack.c.l.b16 %v271
        %v408 = vunpack.c.h.b16 %v271
        %v409 = vunpack.c.l.b16 %v272
        %v410 = vunpack.c.h.b16 %v272
        %v411 = vunpack.c.l.b16 %v273
        %v412 = vunpack.c.h.b16 %v273
        %v413 = vunpack.c.l.b16 %v274
        %v414 = vunpack.c.h.b16 %v274
        %v415 = vpack.c.b16 %v407, %v407
        %v416 = vpack.c.b16 %v408, %v408
        %v417 = vpack.c.b16 %v409, %v409
        %v418 = vpack.c.b16 %v410, %v410
        %v419 = vpack.c.b16 %v411, %v411
        %v420 = vpack.c.b16 %v412, %v412
        %v421 = vpack.c.b16 %v413, %v413
        %v422 = vpack.c.b16 %v414, %v414
        %v559 = vunpack.c.l.b16 %v275
        %v560 = vunpack.c.l.b16 %v276
        %v561 = vunpack.c.l.b16 %v277
        %v562 = vunpack.c.l.b16 %v278
        %v563 = vunpack.c.l.b16 %v279
        %v564 = vunpack.c.l.b16 %v280
        %v565 = vunpack.c.l.b16 %v281
        %v566 = vunpack.c.l.b16 %v282
        %v567 = vunpack.c.l.b16 %v283
        %v568 = vunpack.c.l.b16 %v284
        %v569 = vunpack.c.l.b16 %v285
        %v570 = vunpack.c.l.b16 %v286
        %v571 = vunpack.c.l.b16 %v287
        %v572 = vunpack.c.l.b16 %v288
        %v573 = vunpack.c.l.b16 %v289
        %v574 = vunpack.c.l.b16 %v290
        %v575 = vunpack.c.l.b16 %v291
        %v576 = vunpack.c.l.b16 %v292
        %v577 = vunpack.c.l.b16 %v293
        %v578 = vunpack.c.l.b16 %v294
        %v579 = vunpack.c.l.b16 %v295
        %v580 = vunpack.c.l.b16 %v296
        %v581 = vunpack.c.l.b16 %v297
        %v582 = vunpack.c.l.b16 %v298
        %v583 = vunpack.c.l.b16 %v299
        %v584 = vunpack.c.l.b16 %v300
        %v585 = vunpack.c.l.b16 %v301
        %v586 = vunpack.c.l.b16 %v302
        %v587 = vunpack.c.l.b16 %v303
        %v588 = vunpack.c.l.b16 %v304
        %v589 = vunpack.c.l.b16 %v305
        %v590 = vunpack.c.l.b16 %v306
        %v591 = vunpack.c.l.b16 %v307
        %v592 = vunpack.c.l.b16 %v308
        %v593 = vunpack.c.l.b16 %v309
        %v594 = vunpack.c.l.b16 %v310
        %v595 = vunpack.c.l.b16 %v311
        %v596 = vunpack.c.l.b16 %v312
        %v597 = vunpack.c.l.b16 %v313
        %v598 = vunpack.c.l.b16 %v314
        %v599 = vunpack.c.l.b16 %v315
        %v600 = vunpack.c.l.b16 %v316
        %v601 = vunpack.c.l.b16 %v317
        %v602 = vunpack.c.l.b16 %v318
        %v603 = vunpack.c.l.b16 %v319
        %v604 = vunpack.c.l.b16 %v320
        %v605 = vunpack.c.l.b16 %v321
        %v606 = vunpack.c.l.b16 %v322
        %v607 = vunpack.c.l.b16 %v323
        %v608 = vunpack.c.l.b16 %v324
        %v609 = vunpack.c.l.b16 %v325
        %v610 = vunpack.c.l.b16 %v326
        %v611 = vunpack.c.l.b16 %v327
        %v612 = vunpack.c.l.b16 %v328
        %v613 = vunpack.c.l.b16 %v329
        %v614 = vunpack.c.l.b16 %v330
        %v615 = vunpack.c.l.b16 %v331
        %v616 = vunpack.c.l.b16 %v332
        %v617 = vunpack.c.l.b16 %v333
        %v618 = vunpack.c.l.b16 %v334
        %v619 = vunpack.c.l.b16 %v335
        %v620 = vunpack.c.l.b16 %v336
        %v621 = vunpack.c.l.b16 %v337
        %v622 = vunpack.c.l.b16 %v338
        %v623 = vunpack.c.l.b16 %v339
        %v624 = vunpack.c.l.b16 %v340
        %v625 = vunpack.c.l.b16 %v341
        %v626 = vunpack.c.l.b16 %v342
        %v627 = vunpack.c.l.b16 %v343
        %v628 = vunpack.c.l.b16 %v344
        %v629 = vunpack.c.l.b16 %v345
        %v630 = vunpack.c.l.b16 %v346
        %v631 = vunpack.c.l.b16 %v347
        %v632 = vunpack.c.l.b16 %v348
        %v633 = vunpack.c.l.b16 %v349
        %v634 = vunpack.c.l.b16 %v350
        %v635 = vunpack.c.l.b16 %v351
        %v636 = vunpack.c.l.b16 %v352
        %v637 = vunpack.c.l.b16 %v353
        %v638 = vunpack.c.l.b16 %v354
        %v639 = vunpack.c.l.b16 %v355
        %v640 = vunpack.c.l.b16 %v356
        %v641 = vunpack.c.l.b16 %v357
        %v642 = vunpack.c.l.b16 %v358
        %v643 = vunpack.c.l.b16 %v359
        %v644 = vunpack.c.l.b16 %v360
        %v645 = vunpack.c.l.b16 %v361
        %v646 = vunpack.c.l.b16 %v362
        %v647 = vunpack.c.l.b16 %v363
        %v648 = vunpack.c.l.b16 %v364
        %v649 = vunpack.c.l.b16 %v365
        %v650 = vunpack.c.l.b16 %v366
        %v651 = vunpack.c.l.b16 %v367
        %v652 = vunpack.c.l.b16 %v368
        %v653 = vunpack.c.l.b16 %v369
        %v654 = vunpack.c.l.b16 %v370
        %v655 = vunpack.c.l.b16 %v371
        %v656 = vunpack.c.l.b16 %v372
        %v657 = vunpack.c.l.b16 %v373
        %v658 = vunpack.c.l.b16 %v374
        %v659 = vunpack.c.l.b16 %v375
        %v660 = vunpack.c.l.b16 %v376
        %v661 = vunpack.c.l.b16 %v377
        %v662 = vunpack.c.l.b16 %v378
        %v663 = vunpack.c.l.b16 %v379
        %v664 = vunpack.c.l.b16 %v380
        %v665 = vunpack.c.l.b16 %v381
        %v666 = vunpack.c.l.b16 %v382
        %v667 = vunpack.c.l.b16 %v383
        %v668 = vunpack.c.l.b16 %v384
        %v669 = vunpack.c.l.b16 %v385
        %v670 = vunpack.c.l.b16 %v386
        %v671 = vunpack.c.l.b16 %v387
        %v672 = vunpack.c.l.b16 %v388
        %v673 = vunpack.c.l.b16 %v389
        %v674 = vunpack.c.l.b16 %v390
        %v675 = vunpack.c.l.b16 %v391
        %v676 = vunpack.c.l.b16 %v392
        %v677 = vunpack.c.l.b16 %v393
        %v678 = vunpack.c.l.b16 %v394
        %v679 = vunpack.c.l.b16 %v395
        %v680 = vunpack.c.l.b16 %v396
        %v681 = vunpack.c.l.b16 %v397
        %v682 = vunpack.c.l.b16 %v398
        %v683 = vunpack.c.l.b16 %v399
        %v684 = vunpack.c.l.b16 %v400
        %v685 = vunpack.c.l.b16 %v401
        %v686 = vunpack.c.l.b16 %v402
        %v687 = vpack.c.b16 %v560, %v559
        %v688 = vpack.c.b16 %v562, %v561
        %v689 = vpack.c.b16 %v564, %v563
        %v690 = vpack.c.b16 %v566, %v565
        %v691 = vpack.c.b16 %v568, %v567
        %v692 = vpack.c.b16 %v570, %v569
        %v693 = vpack.c.b16 %v572, %v571
        %v694 = vpack.c.b16 %v574, %v573
        %v695 = vpack.c.b16 %v576, %v575
        %v696 = vpack.c.b16 %v578, %v577
        %v697 = vpack.c.b16 %v580, %v579
        %v698 = vpack.c.b16 %v582, %v581
        %v699 = vpack.c.b16 %v584, %v583
        %v700 = vpack.c.b16 %v586, %v585
        %v701 = vpack.c.b16 %v588, %v587
        %v702 = vpack.c.b16 %v590, %v589
        %v703 = vpack.c.b16 %v592, %v591
        %v704 = vpack.c.b16 %v594, %v593
        %v705 = vpack.c.b16 %v596, %v595
        %v706 = vpack.c.b16 %v598, %v597
        %v707 = vpack.c.b16 %v600, %v599
        %v708 = vpack.c.b16 %v602, %v601
        %v709 = vpack.c.b16 %v604, %v603
        %v710 = vpack.c.b16 %v606, %v605
        %v711 = vpack.c.b16 %v608, %v607
        %v712 = vpack.c.b16 %v610, %v609
        %v713 = vpack.c.b16 %v612, %v611
        %v714 = vpack.c.b16 %v614, %v613
        %v715 = vpack.c.b16 %v616, %v615
        %v716 = vpack.c.b16 %v618, %v617
        %v717 = vpack.c.b16 %v620, %v619
        %v718 = vpack.c.b16 %v622, %v621
        %v719 = vpack.c.b16 %v624, %v623
        %v720 = vpack.c.b16 %v626, %v625
        %v721 = vpack.c.b16 %v628, %v627
        %v722 = vpack.c.b16 %v630, %v629
        %v723 = vpack.c.b16 %v632, %v631
        %v724 = vpack.c.b16 %v634, %v633
        %v725 = vpack.c.b16 %v636, %v635
        %v726 = vpack.c.b16 %v638, %v637
        %v727 = vpack.c.b16 %v640, %v639
        %v728 = vpack.c.b16 %v642, %v641
        %v729 = vpack.c.b16 %v644, %v643
        %v730 = vpack.c.b16 %v646, %v645
        %v731 = vpack.c.b16 %v648, %v647
        %v732 = vpack.c.b16 %v650, %v649
        %v733 = vpack.c.b16 %v652, %v651
        %v734 = vpack.c.b16 %v654, %v653
        %v735 = vpack.c.b16 %v656, %v655
        %v736 = vpack.c.b16 %v658, %v657
        %v737 = vpack.c.b16 %v660, %v659
        %v738 = vpack.c.b16 %v662, %v661
        %v739 = vpack.c.b16 %v664, %v663
        %v740 = vpack.c.b16 %v666, %v665
        %v741 = vpack.c.b16 %v668, %v667
        %v742 = vpack.c.b16 %v670, %v669
        %v743 = vpack.c.b16 %v672, %v671
        %v744 = vpack.c.b16 %v674, %v673
        %v745 = vpack.c.b16 %v676, %v675
        %v746 = vpack.c.b16 %v678, %v677
        %v747 = vpack.c.b16 %v680, %v679
        %v748 = vpack.c.b16 %v682, %v681
        %v749 = vpack.c.b16 %v684, %v683
        %v750 = vpack.c.b16 %v686, %v685
        %815 = vmatprep.subr.bf16.mxu0 0
        %816 = vmatpush1.bf16.msra.mxu0 %v687
        %817 = vmatprep.subr.bf16.mxu0 0
        %818 = vmatpush1.bf16.msra.mxu0 %v688
        %819 = vmatprep.subr.bf16.mxu0 0
        %820 = vmatpush1.bf16.msra.mxu0 %v689
        %821 = vmatprep.subr.bf16.mxu0 0
        %822 = vmatpush1.bf16.msra.mxu0 %v690
        %823 = vmatprep.subr.bf16.mxu0 0
        %824 = vmatpush1.bf16.msra.mxu0 %v691
        %825 = vmatprep.subr.bf16.mxu0 0
        %826 = vmatpush1.bf16.msra.mxu0 %v692
        %827 = vmatprep.subr.bf16.mxu0 0
        %828 = vmatpush1.bf16.msra.mxu0 %v693
        %829 = vmatprep.subr.bf16.mxu0 0
        %830 = vmatpush1.bf16.msra.mxu0 %v694
        %831 = vmatprep.subr.bf16.mxu0 0
        %832 = vmatpush1.bf16.msra.mxu0 %v695
        %833 = vmatprep.subr.bf16.mxu0 0
        %834 = vmatpush1.bf16.msra.mxu0 %v696
        %835 = vmatprep.subr.bf16.mxu0 0
        %836 = vmatpush1.bf16.msra.mxu0 %v697
        %837 = vmatprep.subr.bf16.mxu0 0
        %838 = vmatpush1.bf16.msra.mxu0 %v698
        %839 = vmatprep.subr.bf16.mxu0 0
        %840 = vmatpush1.bf16.msra.mxu0 %v699
        %841 = vmatprep.subr.bf16.mxu0 0
        %842 = vmatpush1.bf16.msra.mxu0 %v700
        %843 = vmatprep.subr.bf16.mxu0 0
        %844 = vmatpush1.bf16.msra.mxu0 %v701
        %845 = vmatprep.subr.bf16.mxu0 0
        %846 = vmatpush1.bf16.msra.mxu0 %v702
        %847 = vmatprep.mubr.bf16.mxu0 %v416
        %848 = vmatmul.mubr.bf16.gmra.mrb[0].mxu0 %v415
        %v849 = vpop.f32.mrb[0].mxu0
        %v850 = vadd.f32 0.0, %v849
        %v851 = vpop.f32.mrb[0].mxu0
        %v852 = vpop.f32.mrb[0].mxu0
        %v853 = vpop.f32.mrb[0].mxu0
        %854 = vdwg.mxu0
        %855 = vmatprep.subr.bf16.mxu0 0
        %856 = vmatpush1.bf16.msra.mxu0 %v703
        %857 = vmatprep.subr.bf16.mxu0 0
        %858 = vmatpush1.bf16.msra.mxu0 %v704
        %859 = vmatprep.subr.bf16.mxu0 0
        %860 = vmatpush1.bf16.msra.mxu0 %v705
        %861 = vmatprep.subr.bf16.mxu0 0
        %862 = vmatpush1.bf16.msra.mxu0 %v706
        %863 = vmatprep.subr.bf16.mxu0 0
        %864 = vmatpush1.bf16.msra.mxu0 %v707
        %865 = vmatprep.subr.bf16.mxu0 0
        %866 = vmatpush1.bf16.msra.mxu0 %v708
        %867 = vmatprep.subr.bf16.mxu0 0
        %868 = vmatpush1.bf16.msra.mxu0 %v709
        %869 = vmatprep.subr.bf16.mxu0 0
        %870 = vmatpush1.bf16.msra.mxu0 %v710
        %871 = vmatprep.subr.bf16.mxu0 0
        %872 = vmatpush1.bf16.msra.mxu0 %v711
        %873 = vmatprep.subr.bf16.mxu0 0
        %874 = vmatpush1.bf16.msra.mxu0 %v712
        %875 = vmatprep.subr.bf16.mxu0 0
        %876 = vmatpush1.bf16.msra.mxu0 %v713
        %877 = vmatprep.subr.bf16.mxu0 0
        %878 = vmatpush1.bf16.msra.mxu0 %v714
        %879 = vmatprep.subr.bf16.mxu0 0
        %880 = vmatpush1.bf16.msra.mxu0 %v715
        %881 = vmatprep.subr.bf16.mxu0 0
        %882 = vmatpush1.bf16.msra.mxu0 %v716
        %883 = vmatprep.subr.bf16.mxu0 0
        %884 = vmatpush1.bf16.msra.mxu0 %v717
        %885 = vmatprep.subr.bf16.mxu0 0
        %886 = vmatpush1.bf16.msra.mxu0 %v718
        %887 = vmatprep.mubr.bf16.mxu0 %v418
        %888 = vmatmul.mubr.bf16.gmra.mrb[0].mxu0 %v417
        %v889 = vpop.f32.mrb[0].mxu0
        %v890 = vadd.f32 %v850, %v889
        %v891 = vpop.f32.mrb[0].mxu0
        %v892 = vpop.f32.mrb[0].mxu0
        %v893 = vpop.f32.mrb[0].mxu0
        %894 = vdwg.mxu0
        %895 = vmatprep.subr.bf16.mxu0 0
        %896 = vmatpush1.bf16.msra.mxu0 %v719
        %897 = vmatprep.subr.bf16.mxu0 0
        %898 = vmatpush1.bf16.msra.mxu0 %v720
        %899 = vmatprep.subr.bf16.mxu0 0
        %900 = vmatpush1.bf16.msra.mxu0 %v721
        %901 = vmatprep.subr.bf16.mxu0 0
        %902 = vmatpush1.bf16.msra.mxu0 %v722
        %903 = vmatprep.subr.bf16.mxu0 0
        %904 = vmatpush1.bf16.msra.mxu0 %v723
        %905 = vmatprep.subr.bf16.mxu0 0
        %906 = vmatpush1.bf16.msra.mxu0 %v724
        %907 = vmatprep.subr.bf16.mxu0 0
        %908 = vmatpush1.bf16.msra.mxu0 %v725
        %909 = vmatprep.subr.bf16.mxu0 0
        %910 = vmatpush1.bf16.msra.mxu0 %v726
        %911 = vmatprep.subr.bf16.mxu0 0
        %912 = vmatpush1.bf16.msra.mxu0 %v727
        %913 = vmatprep.subr.bf16.mxu0 0
        %914 = vmatpush1.bf16.msra.mxu0 %v728
        %915 = vmatprep.subr.bf16.mxu0 0
        %916 = vmatpush1.bf16.msra.mxu0 %v729
        %917 = vmatprep.subr.bf16.mxu0 0
        %918 = vmatpush1.bf16.msra.mxu0 %v730
        %919 = vmatprep.subr.bf16.mxu0 0
        %920 = vmatpush1.bf16.msra.mxu0 %v731
        %921 = vmatprep.subr.bf16.mxu0 0
        %922 = vmatpush1.bf16.msra.mxu0 %v732
        %923 = vmatprep.subr.bf16.mxu0 0
        %924 = vmatpush1.bf16.msra.mxu0 %v733
        %925 = vmatprep.subr.bf16.mxu0 0
        %926 = vmatpush1.bf16.msra.mxu0 %v734
        %927 = vmatprep.mubr.bf16.mxu0 %v420
        %928 = vmatmul.mubr.bf16.gmra.mrb[0].mxu0 %v419
        %v929 = vpop.f32.mrb[0].mxu0
        %v930 = vadd.f32 %v890, %v929
        %v931 = vpop.f32.mrb[0].mxu0
        %v932 = vpop.f32.mrb[0].mxu0
        %v933 = vpop.f32.mrb[0].mxu0
        %934 = vdwg.mxu0
        %935 = vmatprep.subr.bf16.mxu0 0
        %936 = vmatpush1.bf16.msra.mxu0 %v735
        %937 = vmatprep.subr.bf16.mxu0 0
        %938 = vmatpush1.bf16.msra.mxu0 %v736
        %939 = vmatprep.subr.bf16.mxu0 0
        %940 = vmatpush1.bf16.msra.mxu0 %v737
        %941 = vmatprep.subr.bf16.mxu0 0
        %942 = vmatpush1.bf16.msra.mxu0 %v738
        %943 = vmatprep.subr.bf16.mxu0 0
        %944 = vmatpush1.bf16.msra.mxu0 %v739
        %945 = vmatprep.subr.bf16.mxu0 0
        %946 = vmatpush1.bf16.msra.mxu0 %v740
        %947 = vmatprep.subr.bf16.mxu0 0
        %948 = vmatpush1.bf16.msra.mxu0 %v741
        %949 = vmatprep.subr.bf16.mxu0 0
        %950 = vmatpush1.bf16.msra.mxu0 %v742
        %951 = vmatprep.subr.bf16.mxu0 0
        %952 = vmatpush1.bf16.msra.mxu0 %v743
        %953 = vmatprep.subr.bf16.mxu0 0
        %954 = vmatpush1.bf16.msra.mxu0 %v744
        %955 = vmatprep.subr.bf16.mxu0 0
        %956 = vmatpush1.bf16.msra.mxu0 %v745
        %957 = vmatprep.subr.bf16.mxu0 0
        %958 = vmatpush1.bf16.msra.mxu0 %v746
        %959 = vmatprep.subr.bf16.mxu0 0
        %960 = vmatpush1.bf16.msra.mxu0 %v747
        %961 = vmatprep.subr.bf16.mxu0 0
        %962 = vmatpush1.bf16.msra.mxu0 %v748
        %963 = vmatprep.subr.bf16.mxu0 0
        %964 = vmatpush1.bf16.msra.mxu0 %v749
        %965 = vmatprep.subr.bf16.mxu0 0
        %966 = vmatpush1.bf16.msra.mxu0 %v750
        %967 = vmatprep.mubr.bf16.mxu0 %v422
        %968 = vmatmul.mubr.bf16.gmra.mrb[0].mxu0 %v421
        %v969 = vpop.f32.mrb[0].mxu0
        %v970 = vadd.f32 %v930, %v969
        %v971 = vpop.f32.mrb[0].mxu0
        %v972 = vpop.f32.mrb[0].mxu0
        %v973 = vpop.f32.mrb[0].mxu0
        %974 = vdwg.mxu0
        %v975 = vadd.f32 %v270, %v970
        %976 = vst [vmem:[#allocation2] sm:$0xff] %v975
        %p977 = scmp.eq.s32.totalorder %s28, 1
        // Predicated region
        $region45: #{tpu_custom_call.1} parent=31 // pred_check
          %p978 = pneg %p977
        $region46: #{tpu_custom_call.1} parent=31 // pred_check_branch
          %980 = sbr.rel (%p978) target = $region48
        $region47: #{tpu_custom_call.1} parent=31 // pred_region
          %v981 = vld [vmem:[#allocation2] sm:$0xff]
          %v982 = vld [vmem:[%s263] sm:$0x1]
          %v984 = vlaneseq
          %v985 = vshrl.u32 %v984, 7
          %v986 = vsub.s32 0, %v985
          %v987 = vrot.slane %v982, %v986
          %v989 = vadd.f32 %v981, %v987
          %v990 = vpack.c.bf16 %v989, %v989
          %991 = vst [vmem:[#allocation8] sm:$0xf] %v990
        $region48: #{tpu_custom_call.1} parent=31 // pred_fallthru
          _
        // Predicated region
        $region49: #{tpu_custom_call.1} parent=31 // pred_check
          %p992 = pneg %p142
        $region50: #{tpu_custom_call.1} parent=31 // pred_check_branch
          %994 = sbr.rel (%p992) target = $region52
        $region51: #{tpu_custom_call.1} parent=31 // pred_region
          %s996 = ssub.s32 64, 64
          %997 = vsyncadd [#allocation5], %s996
          %s998 = sadd.s32 %s27, %s26
          %s999 = smul.addr %s998, 64
          %s1000 = scalar_lea.hbm %s3, %s999
          %s1002 = sshll.u32 [#allocation8], 4
          %s1003 = int_to_ptr.vmem [resolvable:$true] %s1002
          %1005 = dma.vmem_to_hbm [thread:$0]  %s1003, 64, %s1000, [#allocation5]
        $region52: #{tpu_custom_call.1} parent=31 // pred_fallthru
          _
        // Predicated region
        $region53: #{tpu_custom_call.1} parent=31 // pred_check
          %p1006 = pneg %p142
        $region54: #{tpu_custom_call.1} parent=31 // pred_check_branch
          %1008 = sbr.rel (%p1006) target = $region56
        $region55: #{tpu_custom_call.1} parent=31 // pred_region
          %1009 = dma.done [#allocation5], 64
        $region56: #{tpu_custom_call.1} parent=31 // pred_fallthru
          _
      $region32: #{tpu_custom_call.1} parent=5 // pred_fallthru
        _
      %p1010 = scmp.le.s32.totalorder 2, %s16
      // Predicated region
      $region57: #{tpu_custom_call.1} parent=5 // pred_check
        %p1011 = pneg %p1010
      $region58: #{tpu_custom_call.1} parent=5 // pred_check_branch
        %1013 = sbr.rel (%p1011) target = $region60
      $region59: #{tpu_custom_call.1} parent=5 // pred_region
        %s1014 = ssub.s32 %s16, 2
      $region60: #{tpu_custom_call.1} parent=5 // pred_fallthru
        _
    $region6: #{tpu_custom_call.1} parent=1 // loop_footer
      %s20 = sadd.s32 1, %s16
    $region7: #{tpu_custom_call.1} parent=1 // loop_footer_branch
      %15 = sbr.rel target = $region3
    $region8: #{tpu_custom_call.1} parent=1 // loop_exit
      _
    %1015 = vsyncpa [#allocation4], 1
    %s1016 = scalar_lea.sflag [#allocation4], 1
    %1017 = vsyncpa %s1016, 1
    %1018 = vsyncpa [#allocation7], 1
    %s1019 = scalar_lea.sflag [#allocation7], 1
    %1020 = vsyncpa %s1019, 1
    %1021 = vsyncpa [#allocation5], 1
    %s1022 = scalar_lea.sflag [#allocation5], 1
    %1023 = vsyncpa %s1022, 1

</llo_original>
